<compile_context>
chip_gen: v7x
topology: tpu7x:2x2x1
jax: 0.10.0
libtpu: 0.0.40
codegen_flags: <defaults>
</compile_context>

<pallas_src>
import functools

import jax
import jax.numpy as jnp
from jax import lax
from jax.experimental import pallas as pl
from jax.experimental.pallas import tpu as pltpu


def _memory_fused_kernel(src_ref, qc_ref, wsw_ref, wsb_ref, vtw1_ref,
                         out_ref, acc_ref, *, weights_resident, mxu_dtype):
    """One (batch_tile, hop) grid step.

    src_ref : (BB, T, D)          initial activations (read only at hop == 0)
    qc_ref  : (BB, 1, D)  f32     hoisted query contribution for this hop
    wsw_ref : (H, D, D) | (D, D)  Ws weights (mxu_dtype)
    wsb_ref : (H, 1, D) | (1, D)  Ws biases (f32)
    vtw1_ref: (H, D, D) | (D, D)  rows [:D] of vt weights (mxu_dtype)
    out_ref : (BB, T, D)          HBM-bound output block (written at last hop)
    acc_ref : (BB, T, D) f32      VMEM scratch carrying inter-hop activations
    """
    hop = pl.program_id(1)
    last_hop = pl.num_programs(1) - 1
    bb, t, d = out_ref.shape

    # This hop's weights: VMEM-resident stacks indexed by hop, or per-hop blocks.
    if weights_resident:
        ws_w = wsw_ref[hop]          # (D, D)
        ws_b = wsb_ref[hop]          # (1, D)
        vt_w = vtw1_ref[hop]         # (D, D)
    else:
        ws_w = wsw_ref[...]
        ws_b = wsb_ref[...]
        vt_w = vtw1_ref[...]

    # Hop 0 reads the freshly DMA'd src tile; later hops read the f32 scratch.
    # (No hop-0 store+load round-trip, no per-hop f32<->out-dtype casts.)
    x = lax.cond(
        hop == 0,
        lambda: src_ref[...].astype(jnp.float32),
        lambda: acc_ref[...],
    ).reshape(bb * t, d)

    # src branch:  tanh(x @ Ws + bs) @ vt[:D]
    # MXU gets mxu_dtype (bf16) operands with f32 accumulation; the tanh, bias
    # add and query add stay in f32 on the VPU/EUP.
    s = jnp.tanh(
        jnp.dot(x.astype(mxu_dtype), ws_w, preferred_element_type=jnp.float32)
        + ws_b.astype(jnp.float32))
    y = jnp.dot(s.astype(mxu_dtype), vt_w, preferred_element_type=jnp.float32)

    # Add hoisted query branch (broadcast over T).
    y = y.reshape(bb, t, d) + qc_ref[...].astype(jnp.float32)

    @pl.when(hop < last_hop)
    def _():
        acc_ref[...] = y             # stays resident for the next hop

    @pl.when(hop == last_hop)
    def _():
        out_ref[...] = y.astype(out_ref.dtype)   # single HBM-bound store


def _pick_batch_tile(B, T, D, act_bytes, weight_bytes, vmem_budget,
                     target_rows=1024):
    """Largest BB dividing B that fits the VMEM budget; prefers >= 2 batch
    tiles so the 'parallel' grid axis can shard across v7x's two TensorCores."""

    def tile_bytes(bb):
        return (2 * bb * T * D * act_bytes      # src block, double-buffered
                + 2 * bb * T * D * act_bytes    # out block, double-buffered
                + 2 * bb * D * 4                # q_contrib blocks
                + bb * T * D * 4)               # f32 inter-hop scratch

    divisors = [d for d in range(1, B + 1) if B % d == 0]
    fitting = [d for d in divisors
               if weight_bytes + tile_bytes(d) <= vmem_budget
               and d * T <= max(target_rows, T)]
    if not fitting:
        # TODO(synk): even BB=1 over budget would need a T-tiling grid axis.
        return 1
    bb = max(fitting)

    # Keep grid[0] >= 2 when it does not shrink the tile below ~256 rows (or
    # when the tile is overhead-dominated anyway).
    if B // bb < 2 and B >= 2:
        smaller = [d for d in fitting if d <= B // 2]
        if smaller and (max(smaller) * T >= 256 or bb * T < 256):
            bb = max(smaller)
    # TODO(synk): odd/prime B collapses to BB=1; pad B or use a masked last
    # tile for production shapes so BB*T stays >= one full MXU tile.
    return bb


def memory_forward(src, query, params, *, mxu_dtype=jnp.bfloat16,
                   vmem_budget_bytes=44 * 1024 * 1024):
    """Fused multi-hop Memory.forward.

    src:   (B, T, D)
    query: (B, 1, D)
    params: stacked per-hop weights, all pre-transposed to (in, out):
        ws_w (H, D, D), ws_b (H, 1, D),
        wq_w (H, D, D), wq_b (H, 1, D),
        vt_w (H, 2D, D), vt_b (H, 1, D)
    mxu_dtype: operand dtype for the two in-kernel matmuls (bf16 default;
        accumulation is always f32).
    """
    ws_w, ws_b, wq_w, wq_b, vt_w, vt_b = params
    B, T, D = src.shape
    H = ws_w.shape[0]
    # TODO(synk): for production shapes keep D a multiple of 128 and BB*T a
    # multiple of the MXU tile; at D=32 the kernel is overhead/VPU bound.

    # Hoisted query branch (tiny, depends only on hop + batch):
    #   q_contrib[h, b] = tanh(query[b] @ Wq[h] + bq[h]) @ vt_w[h, D:] + bvt[h]
    qh = jnp.tanh(
        jnp.einsum('bqd,hde->hbqe', query.astype(jnp.float32),
                   wq_w.astype(jnp.float32),
                   preferred_element_type=jnp.float32)
        + wq_b[:, None].astype(jnp.float32))
    q_contrib = (jnp.einsum('hbqd,hde->hbqe', qh,
                            vt_w[:, D:, :].astype(jnp.float32),
                            preferred_element_type=jnp.float32)
                 + vt_b[:, None].astype(jnp.float32))            # (H, B, 1, D)

    # MXU operands (bf16 by default): halves weight DMA bytes + VMEM footprint.
    ws_w_m = ws_w.astype(mxu_dtype)                              # (H, D, D)
    vt_w1_m = vt_w[:, :D, :].astype(mxu_dtype)                   # (H, D, D)
    ws_b_f = ws_b.astype(jnp.float32)                            # (H, 1, D)

    act_bytes = jnp.dtype(src.dtype).itemsize
    mxu_bytes = jnp.dtype(mxu_dtype).itemsize
    resident_w_bytes = H * (2 * D * D * mxu_bytes + D * 4)
    weights_resident = resident_w_bytes <= vmem_budget_bytes // 2
    # Non-resident fallback: per-hop (double/triple-buffered) weight blocks.
    w_budget = (resident_w_bytes if weights_resident
                else 3 * (2 * D * D * mxu_bytes + D * 4))

    BB = _pick_batch_tile(B, T, D, act_bytes, w_budget, vmem_budget_bytes)
    grid = (B // BB, H)

    if weights_resident:
        # One DMA per kernel for every hop's weights; indexed by hop in-kernel.
        whole = lambda bt, h: (0, 0, 0)
        w_specs = [
            pl.BlockSpec((H, D, D), whole),     # Ws weights (all hops)
            pl.BlockSpec((H, 1, D), whole),     # Ws biases  (all hops)
            pl.BlockSpec((H, D, D), whole),     # vt[:D]     (all hops)
        ]
    else:
        hop_only = lambda bt, h: (h, 0, 0)
        w_specs = [
            pl.BlockSpec((None, D, D), hop_only),
            pl.BlockSpec((None, 1, D), hop_only),
            pl.BlockSpec((None, D, D), hop_only),
        ]

    tile_bytes = (2 * BB * T * D * act_bytes * 2     # src + out, double-buffered
                  + 2 * BB * D * 4                   # q_contrib blocks
                  + BB * T * D * 4)                  # f32 scratch
    est = w_budget + tile_bytes + (8 << 20)
    vmem_limit = int(min(56 << 20, max(32 << 20, est)))   # safe on v5e..v7x

    kernel = functools.partial(_memory_fused_kernel,
                               weights_resident=weights_resident,
                               mxu_dtype=mxu_dtype)

    return pl.pallas_call(
        kernel,
        out_shape=jax.ShapeDtypeStruct((B, T, D), src.dtype),
        grid_spec=pltpu.PrefetchScalarGridSpec(
            num_scalar_prefetch=0,
            grid=grid,
            in_specs=[
                # src block index constant across the hop axis -> one DMA per
                # batch tile, read only at hop 0.
                pl.BlockSpec((BB, T, D), lambda bt, h: (bt, 0, 0)),
                pl.BlockSpec((None, BB, 1, D), lambda bt, h: (h, bt, 0, 0)),
            ] + w_specs,
            # Same block index across the hop axis => output written to HBM
            # only once per batch tile (stored at the last hop).
            out_specs=pl.BlockSpec((BB, T, D), lambda bt, h: (bt, 0, 0)),
            scratch_shapes=[pltpu.VMEM((BB, T, D), jnp.float32)],
        ),
        compiler_params=pltpu.CompilerParams(
            dimension_semantics=("parallel", "arbitrary"),
            vmem_limit_bytes=vmem_limit),
    )(src, q_contrib, ws_w_m, ws_b_f, vt_w1_m)


def init_memory_params(key, hops, d_model, dtype=jnp.float32):
    """Deterministic synthetic stacked parameters (weights as (in, out))."""
    ks = jax.random.split(key, 6)
    scale = 0.1
    D = d_model
    ws_w = scale * jax.random.normal(ks[0], (hops, D, D), dtype)
    ws_b = scale * jax.random.normal(ks[1], (hops, 1, D), dtype)
    wq_w = scale * jax.random.normal(ks[2], (hops, D, D), dtype)
    wq_b = scale * jax.random.normal(ks[3], (hops, 1, D), dtype)
    vt_w = scale * jax.random.normal(ks[4], (hops, 2 * D, D), dtype)
    vt_b = scale * jax.random.normal(ks[5], (hops, 1, D), dtype)
    return ws_w, ws_b, wq_w, wq_b, vt_w, vt_b


def memory_forward_ref(src, query, params):
    """Pure-JAX reference matching the PyTorch module exactly (f32)."""
    ws_w, ws_b, wq_w, wq_b, vt_w, vt_b = params
    for i in range(ws_w.shape[0]):
        src_proj = src @ ws_w[i] + ws_b[i]
        query_proj = query @ wq_w[i] + wq_b[i]           # (B, 1, D)
        query_proj = jnp.broadcast_to(query_proj, src_proj.shape)
        cat_proj = jnp.concatenate([src_proj, query_proj], axis=-1)
        src = jnp.tanh(cat_proj) @ vt_w[i] + vt_b[i]
    return src


if __name__ == "__main__":
    B, T, D = 2, 8, 32
    HOPS = 3

    key = jax.random.PRNGKey(0)
    k_src, k_q, k_p = jax.random.split(key, 3)

    src = jax.random.normal(k_src, (B, T, D), jnp.float32)
    query = jax.random.normal(k_q, (B, 1, D), jnp.float32)
    params = init_memory_params(k_p, HOPS, D)

    ref = memory_forward_ref(src, query, params)

    # 1) Exact-algebra check: f32 MXU operands must match the reference tightly
    #    (proves the concat/tanh split + hoisted query branch are exact).
    out_f32 = jax.block_until_ready(
        jax.jit(functools.partial(memory_forward, mxu_dtype=jnp.float32))(
            src, query, params))
    assert out_f32.shape == (B, T, D)
    assert jnp.allclose(out_f32, ref, atol=1e-4, rtol=1e-4), "f32 mismatch"

    # 2) Default fast path: bf16 MXU operands with f32 accumulation
    #    (bf16 operand rounding -> looser tolerance vs the f32 reference).
    out_bf16 = jax.block_until_ready(
        jax.jit(memory_forward)(src, query, params))
    assert out_bf16.shape == (B, T, D)
    assert jnp.allclose(out_bf16, ref, atol=3e-2, rtol=3e-2), "bf16 mismatch"

    print("KERNEL_OK")
</pallas_src>

<mosaic_0001>
module attributes {stable_mosaic.version = 11 : i64} {
  func.func @_memory_fused_kernel(%arg0: i32, %arg1: i32, %arg2: memref<1x8x32xf32, #tpu.memory_space<vmem>>, %arg3: memref<1x1x1x32xf32, #tpu.memory_space<vmem>>, %arg4: memref<3x32x32xf32, #tpu.memory_space<vmem>>, %arg5: memref<3x1x32xf32, #tpu.memory_space<vmem>>, %arg6: memref<3x32x32xf32, #tpu.memory_space<vmem>>, %arg7: memref<1x8x32xf32, #tpu.memory_space<vmem>>, %arg8: memref<1x8x32xf32, #tpu.memory_space<vmem>>) attributes {dimension_semantics = [#tpu.dimension_semantics<parallel>, #tpu.dimension_semantics<arbitrary>], iteration_bounds = array<i64: 2, 3>, scalar_prefetch = 0 : i64, scratch_operands = 1 : i64, tpu.core_type = #tpu.core_type<tc>, window_params = [{transform_indices = @transform_0, window_bounds = array<i64: 1, 8, 32>}, {transform_indices = @transform_1, window_bounds = array<i64: 1, 1, 1, 32>}, {pipeline_mode = #tpu.pipeline_mode<synchronous>, transform_indices = @transform_2, window_bounds = array<i64: 3, 32, 32>}, {pipeline_mode = #tpu.pipeline_mode<synchronous>, transform_indices = @transform_3, window_bounds = array<i64: 3, 1, 32>}, {pipeline_mode = #tpu.pipeline_mode<synchronous>, transform_indices = @transform_4, window_bounds = array<i64: 3, 32, 32>}, {transform_indices = @transform_5, window_bounds = array<i64: 1, 8, 32>}]} {
    %0 = arith.index_cast %arg1 : i32 to index
    %c0 = arith.constant 0 : index
    %c0_0 = arith.constant 0 : index
    %1 = vector.load %arg4[%0, %c0, %c0_0] : memref<3x32x32xf32, #tpu.memory_space<vmem>>, vector<1x32x32xf32>
    %2 = vector.shape_cast %1 : vector<1x32x32xf32> to vector<32x32xf32>
    %3 = arith.index_cast %arg1 : i32 to index
    %c0_1 = arith.constant 0 : index
    %c0_2 = arith.constant 0 : index
    %4 = vector.load %arg5[%3, %c0_1, %c0_2] : memref<3x1x32xf32, #tpu.memory_space<vmem>>, vector<1x1x32xf32>
    %5 = vector.shape_cast %4 : vector<1x1x32xf32> to vector<1x32xf32>
    %6 = arith.index_cast %arg1 : i32 to index
    %c0_3 = arith.constant 0 : index
    %c0_4 = arith.constant 0 : index
    %7 = vector.load %arg6[%6, %c0_3, %c0_4] : memref<3x32x32xf32, #tpu.memory_space<vmem>>, vector<1x32x32xf32>
    %8 = vector.shape_cast %7 : vector<1x32x32xf32> to vector<32x32xf32>
    %c0_i32 = arith.constant 0 : i32
    %9 = arith.cmpi eq, %arg1, %c0_i32 : i32
    %10 = arith.extui %9 : i1 to i32
    %c0_i32_5 = arith.constant 0 : i32
    %11 = arith.cmpi ne, %10, %c0_i32_5 : i32
    %12 = scf.if %11 -> (vector<1x8x32xf32>) {
      %c0_14 = arith.constant 0 : index
      %c0_15 = arith.constant 0 : index
      %c0_16 = arith.constant 0 : index
      %30 = vector.load %arg2[%c0_14, %c0_15, %c0_16] : memref<1x8x32xf32, #tpu.memory_space<vmem>>, vector<1x8x32xf32>
      scf.yield %30 : vector<1x8x32xf32>
    } else {
      %c0_14 = arith.constant 0 : index
      %c0_15 = arith.constant 0 : index
      %c0_16 = arith.constant 0 : index
      %30 = vector.load %arg8[%c0_14, %c0_15, %c0_16] : memref<1x8x32xf32, #tpu.memory_space<vmem>>, vector<1x8x32xf32>
      scf.yield %30 : vector<1x8x32xf32>
    }
    %13 = vector.shape_cast %12 : vector<1x8x32xf32> to vector<8x32xf32>
    %cst = arith.constant dense<0.000000e+00> : vector<8x32xf32>
    %14 = tpu.matmul %13, %2, %cst {dimension_numbers = #tpu.dot_dimension_numbers<[1], [0], [0], [1], [0, 0, 1, 1], [], []>} : vector<8x32xf32>, vector<32x32xf32>, vector<8x32xf32> -> vector<8x32xf32>
    %15 = vector.broadcast %5 : vector<1x32xf32> to vector<8x32xf32>
    %16 = arith.addf %14, %15 : vector<8x32xf32>
    %17 = math.tanh %16 : vector<8x32xf32>
    %cst_6 = arith.constant dense<0.000000e+00> : vector<8x32xf32>
    %18 = tpu.matmul %17, %8, %cst_6 {dimension_numbers = #tpu.dot_dimension_numbers<[1], [0], [0], [1], [0, 0, 1, 1], [], []>} : vector<8x32xf32>, vector<32x32xf32>, vector<8x32xf32> -> vector<8x32xf32>
    %19 = vector.shape_cast %18 : vector<8x32xf32> to vector<1x8x32xf32>
    %c0_7 = arith.constant 0 : index
    %c0_8 = arith.constant 0 : index
    %c0_9 = arith.constant 0 : index
    %c0_10 = arith.constant 0 : index
    %20 = vector.load %arg3[%c0_7, %c0_8, %c0_9, %c0_10] : memref<1x1x1x32xf32, #tpu.memory_space<vmem>>, vector<1x1x1x32xf32>
    %21 = vector.shape_cast %20 : vector<1x1x1x32xf32> to vector<1x1x32xf32>
    %22 = vector.broadcast %21 : vector<1x1x32xf32> to vector<1x8x32xf32>
    %23 = arith.addf %19, %22 : vector<1x8x32xf32>
    %c2_i32 = arith.constant 2 : i32
    %24 = arith.cmpi slt, %arg1, %c2_i32 : i32
    %25 = arith.extui %24 : i1 to i32
    %c0_i32_11 = arith.constant 0 : i32
    %26 = arith.cmpi ne, %25, %c0_i32_11 : i32
    scf.if %26 {
      %c0_14 = arith.constant 0 : index
      %c0_15 = arith.constant 0 : index
      %c0_16 = arith.constant 0 : index
      %30 = vector.load %arg8[%c0_14, %c0_15, %c0_16] : memref<1x8x32xf32, #tpu.memory_space<vmem>>, vector<1x8x32xf32>
      tpu.vector_store %arg8[%c0_14, %c0_15, %c0_16], %23 {strides = array<i32>} : memref<1x8x32xf32, #tpu.memory_space<vmem>>, vector<1x8x32xf32>,
    } else {
    }
    %c2_i32_12 = arith.constant 2 : i32
    %27 = arith.cmpi eq, %arg1, %c2_i32_12 : i32
    %28 = arith.extui %27 : i1 to i32
    %c0_i32_13 = arith.constant 0 : i32
    %29 = arith.cmpi ne, %28, %c0_i32_13 : i32
    scf.if %29 {
      %c0_14 = arith.constant 0 : index
      %c0_15 = arith.constant 0 : index
      %c0_16 = arith.constant 0 : index
      %30 = vector.load %arg7[%c0_14, %c0_15, %c0_16] : memref<1x8x32xf32, #tpu.memory_space<vmem>>, vector<1x8x32xf32>
      tpu.vector_store %arg7[%c0_14, %c0_15, %c0_16], %23 {strides = array<i32>} : memref<1x8x32xf32, #tpu.memory_space<vmem>>, vector<1x8x32xf32>,
    } else {
    }
    return
  }
  func.func @transform_0(%arg0: i32, %arg1: i32) -> (i32, i32, i32) {
    %c0_i32 = arith.constant 0 : i32
    %c0_i32_0 = arith.constant 0 : i32
    %c0_i32_1 = arith.constant 0 : i32
    return %arg0, %c0_i32, %c0_i32_0 : i32, i32, i32
  }
  func.func @transform_1(%arg0: i32, %arg1: i32) -> (i32, i32, i32, i32) {
    %c0_i32 = arith.constant 0 : i32
    %c0_i32_0 = arith.constant 0 : i32
    %c0_i32_1 = arith.constant 0 : i32
    return %arg1, %arg0, %c0_i32, %c0_i32_0 : i32, i32, i32, i32
  }
  func.func @transform_2(%arg0: i32, %arg1: i32) -> (i32, i32, i32) {
    %c0_i32 = arith.constant 0 : i32
    %c0_i32_0 = arith.constant 0 : i32
    %c0_i32_1 = arith.constant 0 : i32
    %c0_i32_2 = arith.constant 0 : i32
    return %c0_i32, %c0_i32_0, %c0_i32_1 : i32, i32, i32
  }
  func.func @transform_3(%arg0: i32, %arg1: i32) -> (i32, i32, i32) {
    %c0_i32 = arith.constant 0 : i32
    %c0_i32_0 = arith.constant 0 : i32
    %c0_i32_1 = arith.constant 0 : i32
    %c0_i32_2 = arith.constant 0 : i32
    return %c0_i32, %c0_i32_0, %c0_i32_1 : i32, i32, i32
  }
  func.func @transform_4(%arg0: i32, %arg1: i32) -> (i32, i32, i32) {
    %c0_i32 = arith.constant 0 : i32
    %c0_i32_0 = arith.constant 0 : i32
    %c0_i32_1 = arith.constant 0 : i32
    %c0_i32_2 = arith.constant 0 : i32
    return %c0_i32, %c0_i32_0, %c0_i32_1 : i32, i32, i32
  }
  func.func @transform_5(%arg0: i32, %arg1: i32) -> (i32, i32, i32) {
    %c0_i32 = arith.constant 0 : i32
    %c0_i32_0 = arith.constant 0 : i32
    %c0_i32_1 = arith.constant 0 : i32
    return %arg0, %c0_i32, %c0_i32_0 : i32, i32, i32
  }
}

</mosaic_0001>

<llo_original>
// kernel: memory_forward.1
$region0: #{memory_forward.1}
  #allocation0 [shape = 'u32[]', space=smem, size = 0x4, offset = 0x4, fixed_abs, tag = 'smem constant byte address 0x4 - core index']
  #allocation1 [shape = 'u32[144,128]{1,0:T(1,128)}', space=vmem, size = 0x12000, scoped, tag = 'internal scratch']
  #allocation2 [shape = 'f32[1,8,32]{2,1,0:T(8,128)}', space=vmem, size = 0x1000, scoped, tag = 'scratch operand']
  %s0 = inlined_call_operand.vmem [shape: f32[2,8,32], index: 0, kind: input, shape index: {}]
  %s1 = inlined_call_operand.vmem [shape: f32[3,2,1,32], index: 1, kind: input, shape index: {}]
  %s2 = inlined_call_operand.vmem [shape: f32[3,32,32], index: 2, kind: input, shape index: {}]
  %s3 = inlined_call_operand.vmem [shape: f32[3,1,32], index: 3, kind: input, shape index: {}]
  %s4 = inlined_call_operand.vmem [shape: f32[3,32,32], index: 4, kind: input, shape index: {}]
  %s5 = inlined_call_operand.hbm [shape: f32[2,8,32], index: 5, kind: output, shape index: {}]
  %s6 = sld [smem:[#allocation0]]
  $region69: #{memory_forward.1} parent=0
    _
  %s8 = ssub.s32 1, %s6
  %s9 = scalar_select 0, %s8, %s6
  $region1: #{memory_forward.1} parent=0
    #allocation3 [shape = 'u8[8192]{0}', space=vmem, size = 0x2000, scoped, tag = 'output window, operand 0']
    #allocation4 [shape = 's32[2]{0}', space=sflag, size = 0x8, scoped, tag = 'scoped memory for memory_forward.1']
    %10 = vsyncpa [#allocation4], 0
    %s11 = scalar_lea.sflag [#allocation4], 1
    %12 = vsyncpa %s11, 0
    loop: start=0, step=1, limit=8
    $region2: #{memory_forward.1} parent=1 // loop_pre_header
      _
    $region3: #{memory_forward.1} parent=1 // loop_header
      %s14 = sphi 0, %s18
      %p15 = scmp.ge.s32.totalorder %s14, 8
      %s21 = sphi 0, %s33
      %s22 = sphi 0, %s29
      %s23 = sphi 0, %s21
      %s24 = sphi 0, %s22
      %s25 = sphi 0, %s23
      %s26 = sphi 0, %s24
      %s36 = sphi 0, %s38
      %s39 = sphi 0, %s36
      %s40 = sphi 0, %s39
      %s56 = sphi 0, %s40
      %s64 = sphi 0, %s66
      %s67 = sphi 0, %s64
      %s68 = sphi 0, %s67
      %s84 = sphi 0, %s68
      %s88 = sphi 0, %s88
      %s90 = sphi 0, %s88
      %s91 = sphi 0, %s90
      %s105 = sphi 0, %s91
      %s109 = sphi 0, %s109
      %s111 = sphi 0, %s109
      %s112 = sphi 0, %s111
      %s126 = sphi 0, %s112
      %s130 = sphi 0, %s130
      %s132 = sphi 0, %s130
      %s133 = sphi 0, %s132
      %s147 = sphi 0, %s133
      %s153 = sphi 0, %s155
      %s156 = sphi 0, %s153
      %s157 = sphi 0, %s156
      %s173 = sphi 0, %s157
    $region4: #{memory_forward.1} parent=1 // loop_header_branch
      %17 = sbr.rel (%p15) target = $region8
    $region5: #{memory_forward.1} parent=1 // loop_body
      %s19 = ssub.s32 %s14, 1
      %s20 = ssub.s32 %s14, 2
      %s27 = sadd.s32 1, %s22
      %p28 = scmp.ge.s32.totalorder %s27, 3
      %s29 = scalar_select %p28, 0, %s27
      %s30 = sadd.s32 1, %s21
      %s31 = scalar_select %p28, %s30, %s21
      %p32 = scmp.ge.s32.totalorder %s31, 2
      %s33 = scalar_select %p32, 0, %s31
      %s34 = ssub.s32 %s21, %s33
      %p35 = scmp.eq.s32.totalorder %s34, 0
      %s37 = sadd.s32 %s36, 1
      %s38 = scalar_select %p35, %s36, %s37
      %p41 = pneg %p35
      %p42 = scmp.eq.s32.totalorder %s14, 5
      %p43 = por %p41, %p42
      %p44 = scmp.ne.s32.totalorder %s36, %s39
      %p45 = scmp.eq.s32.totalorder %s14, 0
      %p46 = por %p44, %p45
      %p47 = scmp.ne.s32.totalorder %s36, %s39
      %p48 = scmp.eq.s32.totalorder %s19, 5
      %p49 = por %p47, %p48
      %p50 = scmp.ne.s32.totalorder %s39, %s40
      %p51 = scmp.eq.s32.totalorder %s19, 0
      %p52 = por %p50, %p51
      %p53 = scmp.ne.s32.totalorder %s39, %s40
      %p54 = scmp.eq.s32.totalorder %s20, 5
      %p55 = por %p53, %p54
      %p57 = scmp.ne.s32.totalorder %s40, %s56
      %p58 = scmp.eq.s32.totalorder %s20, 0
      %p59 = por %p57, %p58
      %s60 = ssub.s32 %s22, %s29
      %s61 = ssub.s32 %s21, %s33
      %s62 = sor.u32 %s60, %s61
      %p63 = scmp.eq.s32.totalorder %s62, 0
      %s65 = sadd.s32 %s64, 1
      %s66 = scalar_select %p63, %s64, %s65
      %p69 = pneg %p63
      %p70 = scmp.eq.s32.totalorder %s14, 5
      %p71 = por %p69, %p70
      %p72 = scmp.ne.s32.totalorder %s64, %s67
      %p73 = scmp.eq.s32.totalorder %s14, 0
      %p74 = por %p72, %p73
      %p75 = scmp.ne.s32.totalorder %s64, %s67
      %p76 = scmp.eq.s32.totalorder %s19, 5
      %p77 = por %p75, %p76
      %p78 = scmp.ne.s32.totalorder %s67, %s68
      %p79 = scmp.eq.s32.totalorder %s19, 0
      %p80 = por %p78, %p79
      %p81 = scmp.ne.s32.totalorder %s67, %s68
      %p82 = scmp.eq.s32.totalorder %s20, 5
      %p83 = por %p81, %p82
      %p85 = scmp.ne.s32.totalorder %s68, %s84
      %p86 = scmp.eq.s32.totalorder %s20, 0
      %p87 = por %p85, %p86
      %s89 = sadd.s32 %s88, 1
      %p92 = scmp.eq.s32.totalorder %s14, 5
      %p93 = scmp.ne.s32.totalorder %s88, %s90
      %p94 = scmp.eq.s32.totalorder %s14, 0
      %p95 = por %p93, %p94
      %p96 = scmp.ne.s32.totalorder %s88, %s90
      %p97 = scmp.eq.s32.totalorder %s19, 5
      %p98 = por %p96, %p97
      %p99 = scmp.ne.s32.totalorder %s90, %s91
      %p100 = scmp.eq.s32.totalorder %s19, 0
      %p101 = por %p99, %p100
      %p102 = scmp.ne.s32.totalorder %s90, %s91
      %p103 = scmp.eq.s32.totalorder %s20, 5
      %p104 = por %p102, %p103
      %p106 = scmp.ne.s32.totalorder %s91, %s105
      %p107 = scmp.eq.s32.totalorder %s20, 0
      %p108 = por %p106, %p107
      %s110 = sadd.s32 %s109, 1
      %p113 = scmp.eq.s32.totalorder %s14, 5
      %p114 = scmp.ne.s32.totalorder %s109, %s111
      %p115 = scmp.eq.s32.totalorder %s14, 0
      %p116 = por %p114, %p115
      %p117 = scmp.ne.s32.totalorder %s109, %s111
      %p118 = scmp.eq.s32.totalorder %s19, 5
      %p119 = por %p117, %p118
      %p120 = scmp.ne.s32.totalorder %s111, %s112
      %p121 = scmp.eq.s32.totalorder %s19, 0
      %p122 = por %p120, %p121
      %p123 = scmp.ne.s32.totalorder %s111, %s112
      %p124 = scmp.eq.s32.totalorder %s20, 5
      %p125 = por %p123, %p124
      %p127 = scmp.ne.s32.totalorder %s112, %s126
      %p128 = scmp.eq.s32.totalorder %s20, 0
      %p129 = por %p127, %p128
      %s131 = sadd.s32 %s130, 1
      %p134 = scmp.eq.s32.totalorder %s14, 5
      %p135 = scmp.ne.s32.totalorder %s130, %s132
      %p136 = scmp.eq.s32.totalorder %s14, 0
      %p137 = por %p135, %p136
      %p138 = scmp.ne.s32.totalorder %s130, %s132
      %p139 = scmp.eq.s32.totalorder %s19, 5
      %p140 = por %p138, %p139
      %p141 = scmp.ne.s32.totalorder %s132, %s133
      %p142 = scmp.eq.s32.totalorder %s19, 0
      %p143 = por %p141, %p142
      %p144 = scmp.ne.s32.totalorder %s132, %s133
      %p145 = scmp.eq.s32.totalorder %s20, 5
      %p146 = por %p144, %p145
      %p148 = scmp.ne.s32.totalorder %s133, %s147
      %p149 = scmp.eq.s32.totalorder %s20, 0
      %p150 = por %p148, %p149
      %s151 = ssub.s32 %s21, %s33
      %p152 = scmp.eq.s32.totalorder %s151, 0
      %s154 = sadd.s32 %s153, 1
      %s155 = scalar_select %p152, %s153, %s154
      %p158 = pneg %p152
      %p159 = scmp.eq.s32.totalorder %s14, 5
      %p160 = por %p158, %p159
      %p161 = scmp.ne.s32.totalorder %s153, %s156
      %p162 = scmp.eq.s32.totalorder %s14, 0
      %p163 = por %p161, %p162
      %p164 = scmp.ne.s32.totalorder %s153, %s156
      %p165 = scmp.eq.s32.totalorder %s19, 5
      %p166 = por %p164, %p165
      %p167 = scmp.ne.s32.totalorder %s156, %s157
      %p168 = scmp.eq.s32.totalorder %s19, 0
      %p169 = por %p167, %p168
      %p170 = scmp.ne.s32.totalorder %s156, %s157
      %p171 = scmp.eq.s32.totalorder %s20, 5
      %p172 = por %p170, %p171
      %p174 = scmp.ne.s32.totalorder %s157, %s173
      %p175 = scmp.eq.s32.totalorder %s20, 0
      %p176 = por %p174, %p175
      %p177 = scmp.le.s32.totalorder 1, %s14
      %p178 = scmp.lt.s32.totalorder %s14, 7
      %p179 = pnand %p177, %p178
      %p180 = pneg %p179
      // Predicated region
      $region9: #{memory_forward.1} parent=5 // pred_check
        _
      $region10: #{memory_forward.1} parent=5 // pred_check_branch
        %182 = sbr.rel (%p179) target = $region12
      $region11: #{memory_forward.1} parent=5 // pred_region
        %s183 = ssub.s32 %s14, 1
        // Predicated region
        $region13: #{memory_forward.1} parent=11 // pred_check
          %p184 = pneg %p101
        $region14: #{memory_forward.1} parent=11 // pred_check_branch
          %186 = sbr.rel (%p184) target = $region16
        $region15: #{memory_forward.1} parent=11 // pred_region
          _
        $region16: #{memory_forward.1} parent=11 // pred_fallthru
          _
        // Predicated region
        $region17: #{memory_forward.1} parent=11 // pred_check
          %p187 = pneg %p122
        $region18: #{memory_forward.1} parent=11 // pred_check_branch
          %189 = sbr.rel (%p187) target = $region20
        $region19: #{memory_forward.1} parent=11 // pred_region
          _
        $region20: #{memory_forward.1} parent=11 // pred_fallthru
          _
        // Predicated region
        $region21: #{memory_forward.1} parent=11 // pred_check
          %p190 = pneg %p143
        $region22: #{memory_forward.1} parent=11 // pred_check_branch
          %192 = sbr.rel (%p190) target = $region24
        $region23: #{memory_forward.1} parent=11 // pred_region
          _
        $region24: #{memory_forward.1} parent=11 // pred_fallthru
          _
      $region12: #{memory_forward.1} parent=5 // pred_fallthru
        _
      %p193 = scmp.lt.s32.totalorder %s14, 6
      // Predicated region
      $region25: #{memory_forward.1} parent=5 // pred_check
        %p194 = pneg %p193
      $region26: #{memory_forward.1} parent=5 // pred_check_branch
        %196 = sbr.rel (%p194) target = $region28
      $region27: #{memory_forward.1} parent=5 // pred_region
        // Predicated region
        $region29: #{memory_forward.1} parent=27 // pred_check
          %p197 = pneg %p46
        $region30: #{memory_forward.1} parent=27 // pred_check_branch
          %199 = sbr.rel (%p197) target = $region32
        $region31: #{memory_forward.1} parent=27 // pred_region
          %p200 = scmp.lt.s32.totalorder %s21, 1
          %s201 = scalar_select %p200, %s21, 1
          %s202 = smul.addr %s201, 8
          %s203 = scalar_lea.vmem %s0, %s202
        $region32: #{memory_forward.1} parent=27 // pred_fallthru
          _
        // Predicated region
        $region33: #{memory_forward.1} parent=27 // pred_check
          %p204 = pneg %p74
        $region34: #{memory_forward.1} parent=27 // pred_check_branch
          %206 = sbr.rel (%p204) target = $region36
        $region35: #{memory_forward.1} parent=27 // pred_region
          %p207 = scmp.lt.s32.totalorder %s22, 2
          %s208 = scalar_select %p207, %s22, 2
          %p209 = scmp.lt.s32.totalorder %s21, 1
          %s210 = scalar_select %p209, %s21, 1
          %s211 = smul.addr %s208, 2
          %s212 = sadd.s32 %s210, %s211
          %s213 = scalar_lea.vmem %s1, %s212
        $region36: #{memory_forward.1} parent=27 // pred_fallthru
          _
      $region28: #{memory_forward.1} parent=5 // pred_fallthru
        _
      %p214 = scmp.le.s32.totalorder 1, %s14
      %p215 = scmp.lt.s32.totalorder %s14, 7
      %p216 = pnand %p214, %p215
      %p217 = pneg %p216
      // Predicated region
      $region37: #{memory_forward.1} parent=5 // pred_check
        _
      $region38: #{memory_forward.1} parent=5 // pred_check_branch
        %219 = sbr.rel (%p216) target = $region40
      $region39: #{memory_forward.1} parent=5 // pred_region
        %s220 = ssub.s32 %s14, 1
        %p221 = scmp.lt.s32.totalorder %s23, 1
        %s222 = scalar_select %p221, %s23, 1
        %s223 = smul.addr %s222, 8
        %s224 = scalar_lea.vmem %s0, %s223
        %p225 = pneg %p52
        %p226 = pneg %p49
        %p227 = scmp.lt.s32.totalorder %s24, 2
        %s228 = scalar_select %p227, %s24, 2
        %p229 = scmp.lt.s32.totalorder %s23, 1
        %s230 = scalar_select %p229, %s23, 1
        %s231 = smul.addr %s228, 2
        %s232 = sadd.s32 %s230, %s231
        %s233 = scalar_lea.vmem %s1, %s232
        %p234 = pneg %p80
        %p235 = pneg %p77
        %p236 = pneg %p101
        %p237 = pneg %p98
        %p238 = pneg %p122
        %p239 = pneg %p119
        %p240 = pneg %p143
        %p241 = pneg %p140
        %p242 = pneg %p169
        %p243 = pneg %p166
        %s244 = sand.u32 %s156, 1
        %s245 = scalar_lea.sflag [#allocation4], %s244
        %s246 = sand.u32 %s156, 1
        %s247 = smul.addr %s246, 8
        %s248 = scalar_lea.vmem [#allocation3], %s247
        %p249 = scmp.lt.s32.totalorder %s23, 1
        %s250 = scalar_select %p249, %s23, 1
        %s251 = smul.addr %s250, 8
        %s252 = scalar_lea.vmem %s0, %s251
        %p253 = scmp.lt.s32.totalorder %s24, 2
        %s254 = scalar_select %p253, %s24, 2
        %p255 = scmp.lt.s32.totalorder %s23, 1
        %s256 = scalar_select %p255, %s23, 1
        %s257 = smul.addr %s254, 2
        %s258 = sadd.s32 %s256, %s257
        %s259 = scalar_lea.vmem %s1, %s258
        %s260 = smul.u32 %s24, 32
        %s261 = scalar_lea.vmem %s2, %s260
        %v262 = vld [vmem:[%s261] sm:$0xff]
        %v263 = vld [vmem:[%s261 + $0x8] sm:$0xff]
        %v264 = vld [vmem:[%s261 + $0x10] sm:$0xff]
        %v265 = vld [vmem:[%s261 + $0x18] sm:$0xff]
        %s266 = scalar_lea.vmem %s3, %s24
        %v267 = vld [vmem:[%s266] sm:$0x1]
        %s268 = scalar_lea.vmem %s4, %s260
        %v269 = vld [vmem:[%s268] sm:$0xff]
        %v270 = vld [vmem:[%s268 + $0x8] sm:$0xff]
        %v271 = vld [vmem:[%s268 + $0x10] sm:$0xff]
        %v272 = vld [vmem:[%s268 + $0x18] sm:$0xff]
        %p273 = scmp.eq.s32.totalorder %s24, 0
        // Predicated region
        $region41: #{memory_forward.1} parent=39 // pred_check
          %p274 = pneg %p273
        $region42: #{memory_forward.1} parent=39 // pred_check_branch
          %276 = sbr.rel (%p274) target = $region44
        $region43: #{memory_forward.1} parent=39 // pred_region
          %v277 = vld [vmem:[%s252] sm:$0xff]
        $region44: #{memory_forward.1} parent=39 // pred_fallthru
          %v278 = vphi 0, %v277
        %p279 = pneg %p273
        // Predicated region
        $region45: #{memory_forward.1} parent=39 // pred_check
          _
        $region46: #{memory_forward.1} parent=39 // pred_check_branch
          %281 = sbr.rel (%p273) target = $region48
        $region47: #{memory_forward.1} parent=39 // pred_region
          %v282 = vld [vmem:[#allocation2] sm:$0xff]
        $region48: #{memory_forward.1} parent=39 // pred_fallthru
          %v283 = vphi %v278, %v282
        %v285 = vlaneseq
        %v286 = vshrl.u32 %v285, 7
        %v287 = vsub.s32 0, %v286
        %v288 = vrot.slane %v267, %v287
        %vm290 = vcmask 261120
        %v292 = vsel %vm290, %v283, 0
        %294 = vmatprep.subr.mxu0 0.0
        %295 = vmatpush1.msra.mxu0 %v262
        %296 = vmatprep.subr.mxu0 0.0
        %297 = vmatpush1.msra.mxu0 %v263
        %298 = vmatprep.subr.mxu0 0.0
        %299 = vmatpush1.msra.mxu0 %v264
        %300 = vmatprep.subr.mxu0 0.0
        %301 = vmatpush1.msra.mxu0 %v265
        %302 = vmatprep.subr.mxu0 0.0
        %303 = vmatpush1.msra.mxu0 0.0
        %304 = vmatprep.subr.mxu0 0.0
        %305 = vmatpush1.msra.mxu0 0.0
        %306 = vmatprep.subr.mxu0 0.0
        %307 = vmatpush1.msra.mxu0 0.0
        %308 = vmatprep.subr.mxu0 0.0
        %309 = vmatpush1.msra.mxu0 0.0
        %310 = vmatprep.subr.mxu0 0.0
        %311 = vmatpush1.msra.mxu0 0.0
        %312 = vmatprep.subr.mxu0 0.0
        %313 = vmatpush1.msra.mxu0 0.0
        %314 = vmatprep.subr.mxu0 0.0
        %315 = vmatpush1.msra.mxu0 0.0
        %316 = vmatprep.subr.mxu0 0.0
        %317 = vmatpush1.msra.mxu0 0.0
        %318 = vmatprep.subr.mxu0 0.0
        %319 = vmatpush1.msra.mxu0 0.0
        %320 = vmatprep.subr.mxu0 0.0
        %321 = vmatpush1.msra.mxu0 0.0
        %322 = vmatprep.subr.mxu0 0.0
        %323 = vmatpush1.msra.mxu0 0.0
        %324 = vmatprep.subr.mxu0 0.0
        %325 = vmatpush1.msra.mxu0 0.0
        %326 = vmatprep.subr.mxu0 0.0
        %327 = vmatpush1.msra.mxu0 0.0
        %328 = vmatprep.subr.mxu0 0.0
        %329 = vmatpush1.msra.mxu0 0.0
        %330 = vmatprep.subr.mxu0 0.0
        %331 = vmatpush1.msra.mxu0 0.0
        %332 = vmatprep.subr.mxu0 0.0
        %333 = vmatpush1.msra.mxu0 0.0
        %334 = vmatprep.subr.mxu0 0.0
        %335 = vmatpush1.msra.mxu0 0.0
        %336 = vmatprep.subr.mxu0 0.0
        %337 = vmatpush1.msra.mxu0 0.0
        %338 = vmatprep.subr.mxu0 0.0
        %339 = vmatpush1.msra.mxu0 0.0
        %340 = vmatprep.subr.mxu0 0.0
        %341 = vmatpush1.msra.mxu0 0.0
        %342 = vmatprep.subr.mxu0 0.0
        %343 = vmatpush1.msra.mxu0 0.0
        %344 = vmatprep.subr.mxu0 0.0
        %345 = vmatpush1.msra.mxu0 0.0
        %346 = vmatprep.subr.mxu0 0.0
        %347 = vmatpush1.msra.mxu0 0.0
        %348 = vmatprep.subr.mxu0 0.0
        %349 = vmatpush1.msra.mxu0 0.0
        %350 = vmatprep.subr.mxu0 0.0
        %351 = vmatpush1.msra.mxu0 0.0
        %352 = vmatprep.subr.mxu0 0.0
        %353 = vmatpush1.msra.mxu0 0.0
        %354 = vmatprep.subr.mxu0 0.0
        %355 = vmatpush1.msra.mxu0 0.0
        %356 = vmatprep.subr.mxu0 0.0
        %357 = vmatpush1.msra.mxu0 0.0
        %358 = vmatprep.mubr.f32.mxu0 0.0
        %359 = vmatmul.mubr.f32.gmra.mrb[0].mxu0 %v292
        %v360 = vpop.f32.mrb[0].mxu0
        %v361 = vadd.f32 %v288, %v360
        %v362 = vpop.f32.mrb[0].mxu0
        %363 = vdwg.mxu0
        %v364 = vtanh.pop %v361
        %v366 = vsel %vm290, %v364, 0
        %368 = vmatprep.subr.mxu0 0.0
        %369 = vmatpush1.msra.mxu0 %v269
        %370 = vmatprep.subr.mxu0 0.0
        %371 = vmatpush1.msra.mxu0 %v270
        %372 = vmatprep.subr.mxu0 0.0
        %373 = vmatpush1.msra.mxu0 %v271
        %374 = vmatprep.subr.mxu0 0.0
        %375 = vmatpush1.msra.mxu0 %v272
        %376 = vmatprep.subr.mxu0 0.0
        %377 = vmatpush1.msra.mxu0 0.0
        %378 = vmatprep.subr.mxu0 0.0
        %379 = vmatpush1.msra.mxu0 0.0
        %380 = vmatprep.subr.mxu0 0.0
        %381 = vmatpush1.msra.mxu0 0.0
        %382 = vmatprep.subr.mxu0 0.0
        %383 = vmatpush1.msra.mxu0 0.0
        %384 = vmatprep.subr.mxu0 0.0
        %385 = vmatpush1.msra.mxu0 0.0
        %386 = vmatprep.subr.mxu0 0.0
        %387 = vmatpush1.msra.mxu0 0.0
        %388 = vmatprep.subr.mxu0 0.0
        %389 = vmatpush1.msra.mxu0 0.0
        %390 = vmatprep.subr.mxu0 0.0
        %391 = vmatpush1.msra.mxu0 0.0
        %392 = vmatprep.subr.mxu0 0.0
        %393 = vmatpush1.msra.mxu0 0.0
        %394 = vmatprep.subr.mxu0 0.0
        %395 = vmatpush1.msra.mxu0 0.0
        %396 = vmatprep.subr.mxu0 0.0
        %397 = vmatpush1.msra.mxu0 0.0
        %398 = vmatprep.subr.mxu0 0.0
        %399 = vmatpush1.msra.mxu0 0.0
        %400 = vmatprep.subr.mxu0 0.0
        %401 = vmatpush1.msra.mxu0 0.0
        %402 = vmatprep.subr.mxu0 0.0
        %403 = vmatpush1.msra.mxu0 0.0
        %404 = vmatprep.subr.mxu0 0.0
        %405 = vmatpush1.msra.mxu0 0.0
        %406 = vmatprep.subr.mxu0 0.0
        %407 = vmatpush1.msra.mxu0 0.0
        %408 = vmatprep.subr.mxu0 0.0
        %409 = vmatpush1.msra.mxu0 0.0
        %410 = vmatprep.subr.mxu0 0.0
        %411 = vmatpush1.msra.mxu0 0.0
        %412 = vmatprep.subr.mxu0 0.0
        %413 = vmatpush1.msra.mxu0 0.0
        %414 = vmatprep.subr.mxu0 0.0
        %415 = vmatpush1.msra.mxu0 0.0
        %416 = vmatprep.subr.mxu0 0.0
        %417 = vmatpush1.msra.mxu0 0.0
        %418 = vmatprep.subr.mxu0 0.0
        %419 = vmatpush1.msra.mxu0 0.0
        %420 = vmatprep.subr.mxu0 0.0
        %421 = vmatpush1.msra.mxu0 0.0
        %422 = vmatprep.subr.mxu0 0.0
        %423 = vmatpush1.msra.mxu0 0.0
        %424 = vmatprep.subr.mxu0 0.0
        %425 = vmatpush1.msra.mxu0 0.0
        %426 = vmatprep.subr.mxu0 0.0
        %427 = vmatpush1.msra.mxu0 0.0
        %428 = vmatprep.subr.mxu0 0.0
        %429 = vmatpush1.msra.mxu0 0.0
        %430 = vmatprep.subr.mxu0 0.0
        %431 = vmatpush1.msra.mxu0 0.0
        %432 = vmatprep.mubr.f32.mxu0 0.0
        %433 = vmatmul.mubr.f32.gmra.mrb[0].mxu0 %v366
        %v434 = vpop.f32.mrb[0].mxu0
        %v435 = vadd.f32 0.0, %v434
        %v436 = vpop.f32.mrb[0].mxu0
        %437 = vdwg.mxu0
        %v438 = vld [vmem:[%s259] sm:$0x1]
        %v440 = vlaneseq
        %v441 = vshrl.u32 %v440, 7
        %v442 = vsub.s32 0, %v441
        %v443 = vrot.slane %v438, %v442
        %v445 = vadd.f32 %v435, %v443
        %p446 = scmp.lt.s32.totalorder %s24, 2
        // Predicated region
        $region49: #{memory_forward.1} parent=39 // pred_check
          %p447 = pneg %p446
        $region50: #{memory_forward.1} parent=39 // pred_check_branch
          %449 = sbr.rel (%p447) target = $region52
        $region51: #{memory_forward.1} parent=39 // pred_region
          %450 = vst.msk [vmem:[#allocation2] sm:$0xff] %vm290, %v445
        $region52: #{memory_forward.1} parent=39 // pred_fallthru
          _
        %p451 = scmp.eq.s32.totalorder %s24, 2
        // Predicated region
        $region53: #{memory_forward.1} parent=39 // pred_check
          %p452 = pneg %p451
        $region54: #{memory_forward.1} parent=39 // pred_check_branch
          %454 = sbr.rel (%p452) target = $region56
        $region55: #{memory_forward.1} parent=39 // pred_region
          %455 = vst.msk [vmem:[%s248] sm:$0xff] %vm290, %v445
        $region56: #{memory_forward.1} parent=39 // pred_fallthru
          _
        %s456 = sand.u32 %s156, 1
        %s457 = scalar_lea.sflag [#allocation4], %s456
        %s458 = sand.u32 %s156, 1
        %s459 = smul.addr %s458, 8
        %s460 = scalar_lea.vmem [#allocation3], %s459
        // Predicated region
        $region57: #{memory_forward.1} parent=39 // pred_check
          %p461 = pneg %p166
        $region58: #{memory_forward.1} parent=39 // pred_check_branch
          %463 = sbr.rel (%p461) target = $region60
        $region59: #{memory_forward.1} parent=39 // pred_region
          %s465 = ssub.s32 128, 128
          %466 = vsyncadd %s457, %s465
          %s467 = smul.addr %s23, 128
          %s468 = scalar_lea.hbm %s5, %s467
          %s470 = sshll.u32 %s460, 4
          %s471 = int_to_ptr.vmem [resolvable:$true] %s470
          %473 = dma.vmem_to_hbm [thread:$0]  %s471, 128, %s468, %s457
        $region60: #{memory_forward.1} parent=39 // pred_fallthru
          _
      $region40: #{memory_forward.1} parent=5 // pred_fallthru
        _
      %p474 = scmp.le.s32.totalorder 2, %s14
      // Predicated region
      $region61: #{memory_forward.1} parent=5 // pred_check
        %p475 = pneg %p474
      $region62: #{memory_forward.1} parent=5 // pred_check_branch
        %477 = sbr.rel (%p475) target = $region64
      $region63: #{memory_forward.1} parent=5 // pred_region
        %s478 = ssub.s32 %s14, 2
        // Predicated region
        $region65: #{memory_forward.1} parent=63 // pred_check
          %p479 = pneg %p172
        $region66: #{memory_forward.1} parent=63 // pred_check_branch
          %481 = sbr.rel (%p479) target = $region68
        $region67: #{memory_forward.1} parent=63 // pred_region
          %s482 = sand.u32 %s157, 1
          %s483 = scalar_lea.sflag [#allocation4], %s482
          %s484 = sand.u32 %s157, 1
          %s485 = smul.addr %s484, 8
          %s486 = scalar_lea.vmem [#allocation3], %s485
          %487 = dma.done %s483, 128
        $region68: #{memory_forward.1} parent=63 // pred_fallthru
          _
      $region64: #{memory_forward.1} parent=5 // pred_fallthru
        _
    $region6: #{memory_forward.1} parent=1 // loop_footer
      %s18 = sadd.s32 1, %s14
    $region7: #{memory_forward.1} parent=1 // loop_footer_branch
      %13 = sbr.rel target = $region3
    $region8: #{memory_forward.1} parent=1 // loop_exit
      _
    %488 = vsyncpa [#allocation4], 1
    %s489 = scalar_lea.sflag [#allocation4], 1
    %490 = vsyncpa %s489, 1

</llo_original>
